<compile_context>
chip_gen: v7x
topology: tpu7x:2x2x1
jax: 0.10.0
libtpu: 0.0.40
codegen_flags: <defaults>
</compile_context>

<pallas_src>
import math

import jax
import jax.numpy as jnp
import numpy as np
from jax.experimental import pallas as pl
from jax.experimental.pallas import tpu as pltpu


# ----------------------------- Pallas kernel --------------------------------
def _sgm_kernel(x_ref, adj_ref,
                w1_ref, b1_ref, w2_ref, b2_ref,
                wh_ref, bh_ref,
                out_ref):
    x = x_ref[...]       # (TB, J, F_in)
    adj = adj_ref[...]   # (TB, J, J)
    TB, J, F_in = x.shape
    H = w1_ref.shape[1]

    # gcn1: relu((adj @ x) @ W1 + b1)   -- reordered: F_in < H, ~2x fewer FLOPs.
    ax = jnp.einsum("bij,bjf->bif", adj, x,
                    preferred_element_type=jnp.float32)            # (TB, J, F_in)
    s1 = jnp.dot(ax.reshape(TB * J, F_in), w1_ref[...],
                 preferred_element_type=jnp.float32)               # (TB*J, H)
    h1 = jnp.maximum(s1 + b1_ref[...], 0.0)                        # (TB*J, H)

    # gcn2: relu(adj @ (h1 @ W2) + b2)
    s2 = jnp.dot(h1, w2_ref[...],
                 preferred_element_type=jnp.float32)               # (TB*J, H)
    h2 = jnp.einsum("bij,bjh->bih", adj, s2.reshape(TB, J, H),
                    preferred_element_type=jnp.float32)            # (TB, J, H)
    h2 = jnp.maximum(h2 + b2_ref[...], 0.0)

    # Fused fc_shape / fc_pose heads: one MXU matmul, one bias add, one store.
    out = jnp.dot(h2.reshape(TB * J, H), wh_ref[...],
                  preferred_element_type=jnp.float32) + bh_ref[...]
    out_ref[...] = out.reshape(TB, J, -1).astype(out_ref.dtype)


def skeleton_graph_module(joint_features, adjacency_matrix, params, block_b=None):
    """params: dict with w1, b1, w2, b2, wsh, bsh, wp, bp (biases shaped (1, out))."""
    B, J, F_in = joint_features.shape
    H = params["w1"].shape[1]
    out_shape = params["wsh"].shape[1]
    out_pose = params["wp"].shape[1]
    out_total = out_shape + out_pose

    # Fuse the two heads into a single weight / bias (done once per call,
    # outside the kernel).
    wh = jnp.concatenate([params["wsh"], params["wp"]], axis=1)   # (H, out_total)
    bh = jnp.concatenate([params["bsh"], params["bp"]], axis=1)   # (1, out_total)

    if block_b is None:
        # <= 2 grid steps: minimal serial-step overhead on v5e/v6e, and two
        # parallel steps so a v7x megacore keeps both TensorCores busy.
        n_blocks = 2 if (B >= 2 and B % 2 == 0) else 1
        block_b = B // n_blocks
    assert B % block_b == 0, "batch must be divisible by block_b"
    n_blocks = B // block_b

    full = lambda b: (0, 0)        # weights/biases: single full block every step
    per_blk = lambda b: (b, 0, 0)  # batch-blocked tensors

    fused = pl.pallas_call(
        _sgm_kernel,
        out_shape=jax.ShapeDtypeStruct((B, J, out_total), jnp.float32),
        grid_spec=pltpu.PrefetchScalarGridSpec(
            num_scalar_prefetch=0,
            grid=(n_blocks,),
            in_specs=[
                pl.BlockSpec((block_b, J, F_in), per_blk),   # joint_features
                pl.BlockSpec((block_b, J, J), per_blk),      # adjacency
                pl.BlockSpec((F_in, H), full),               # gcn1 weight
                pl.BlockSpec((1, H), full),                  # gcn1 bias
                pl.BlockSpec((H, H), full),                  # gcn2 weight
                pl.BlockSpec((1, H), full),                  # gcn2 bias
                pl.BlockSpec((H, out_total), full),          # fused head weight
                pl.BlockSpec((1, out_total), full),          # fused head bias
            ],
            out_specs=pl.BlockSpec((block_b, J, out_total), per_blk),
        ),
        compiler_params=pltpu.CompilerParams(
            dimension_semantics=("parallel",)),
    )(joint_features, adjacency_matrix,
      params["w1"], params["b1"], params["w2"], params["b2"], wh, bh)

    # Split the fused head output back into (shape_params, pose_params).
    return fused[..., :out_shape], fused[..., out_shape:]


# ------------------------ parameter init (deterministic) --------------------
def _xavier_uniform(key, fan_in, fan_out):
    a = math.sqrt(6.0 / (fan_in + fan_out))
    return jax.random.uniform(key, (fan_in, fan_out), jnp.float32, -a, a)


def _linear_init(key, in_f, out_f):
    # matches torch nn.Linear default: U(-1/sqrt(in), 1/sqrt(in))
    kw, kb = jax.random.split(key)
    bound = 1.0 / math.sqrt(in_f)
    w_t = jax.random.uniform(kw, (in_f, out_f), jnp.float32, -bound, bound)  # transposed
    b = jax.random.uniform(kb, (1, out_f), jnp.float32, -bound, bound)
    return w_t, b


def init_params(key, in_features, hidden_features, out_shape_params, out_pose_params):
    k1, k2, k3, k4 = jax.random.split(key, 4)
    w1 = _xavier_uniform(k1, in_features, hidden_features)
    b1 = jnp.zeros((1, hidden_features), jnp.float32)
    w2 = _xavier_uniform(k2, hidden_features, hidden_features)
    b2 = jnp.zeros((1, hidden_features), jnp.float32)
    wsh, bsh = _linear_init(k3, hidden_features, out_shape_params)
    wp, bp = _linear_init(k4, hidden_features, out_pose_params)
    return dict(w1=w1, b1=b1, w2=w2, b2=b2, wsh=wsh, bsh=bsh, wp=wp, bp=bp)


# ----------------------------- pure-JAX reference ----------------------------
def reference(joint_features, adjacency_matrix, p):
    s1 = joint_features @ p["w1"]
    h1 = jax.nn.relu(jnp.einsum("bij,bjh->bih", adjacency_matrix, s1) + p["b1"][0])
    s2 = h1 @ p["w2"]
    h2 = jax.nn.relu(jnp.einsum("bij,bjh->bih", adjacency_matrix, s2) + p["b2"][0])
    return h2 @ p["wsh"] + p["bsh"][0], h2 @ p["wp"] + p["bp"][0]


if __name__ == "__main__":
    B, J = 2, 16
    in_features, hidden_features = 8, 32
    out_shape_params, out_pose_params = 10, 24

    key = jax.random.PRNGKey(0)
    k_x, k_adj, k_p = jax.random.split(key, 3)

    joint_features = jax.random.normal(k_x, (B, J, in_features), jnp.float32)
    adjacency_matrix = jax.random.uniform(k_adj, (B, J, J), jnp.float32)

    params = init_params(k_p, in_features, hidden_features,
                         out_shape_params, out_pose_params)

    shape_out, pose_out = skeleton_graph_module(joint_features, adjacency_matrix, params)
    jax.block_until_ready((shape_out, pose_out))

    ref_shape, ref_pose = reference(joint_features, adjacency_matrix, params)
    np.testing.assert_allclose(np.asarray(shape_out), np.asarray(ref_shape),
                               rtol=1e-4, atol=1e-5)
    np.testing.assert_allclose(np.asarray(pose_out), np.asarray(ref_pose),
                               rtol=1e-4, atol=1e-5)

    print("KERNEL_OK")
</pallas_src>

<mosaic_0001>
module attributes {stable_mosaic.version = 11 : i64} {
  func.func @_sgm_kernel(%arg0: i32, %arg1: memref<1x16x8xf32, #tpu.memory_space<vmem>>, %arg2: memref<1x16x16xf32, #tpu.memory_space<vmem>>, %arg3: memref<8x32xf32, #tpu.memory_space<vmem>>, %arg4: memref<1x32xf32, #tpu.memory_space<vmem>>, %arg5: memref<32x32xf32, #tpu.memory_space<vmem>>, %arg6: memref<1x32xf32, #tpu.memory_space<vmem>>, %arg7: memref<32x34xf32, #tpu.memory_space<vmem>>, %arg8: memref<1x34xf32, #tpu.memory_space<vmem>>, %arg9: memref<1x16x34xf32, #tpu.memory_space<vmem>>) attributes {dimension_semantics = [#tpu.dimension_semantics<parallel>], iteration_bounds = array<i64: 2>, scalar_prefetch = 0 : i64, scratch_operands = 0 : i64, tpu.core_type = #tpu.core_type<tc>, window_params = [{transform_indices = @transform_0, window_bounds = array<i64: 1, 16, 8>}, {transform_indices = @transform_1, window_bounds = array<i64: 1, 16, 16>}, {pipeline_mode = #tpu.pipeline_mode<synchronous>, transform_indices = @transform_2, window_bounds = array<i64: 8, 32>}, {pipeline_mode = #tpu.pipeline_mode<synchronous>, transform_indices = @transform_3, window_bounds = array<i64: 1, 32>}, {pipeline_mode = #tpu.pipeline_mode<synchronous>, transform_indices = @transform_4, window_bounds = array<i64: 32, 32>}, {pipeline_mode = #tpu.pipeline_mode<synchronous>, transform_indices = @transform_5, window_bounds = array<i64: 1, 32>}, {pipeline_mode = #tpu.pipeline_mode<synchronous>, transform_indices = @transform_6, window_bounds = array<i64: 32, 34>}, {pipeline_mode = #tpu.pipeline_mode<synchronous>, transform_indices = @transform_7, window_bounds = array<i64: 1, 34>}, {transform_indices = @transform_8, window_bounds = array<i64: 1, 16, 34>}]} {
    %c0 = arith.constant 0 : index
    %c0_0 = arith.constant 0 : index
    %c0_1 = arith.constant 0 : index
    %0 = vector.load %arg1[%c0, %c0_0, %c0_1] : memref<1x16x8xf32, #tpu.memory_space<vmem>>, vector<1x16x8xf32>
    %c0_2 = arith.constant 0 : index
    %c0_3 = arith.constant 0 : index
    %c0_4 = arith.constant 0 : index
    %1 = vector.load %arg2[%c0_2, %c0_3, %c0_4] : memref<1x16x16xf32, #tpu.memory_space<vmem>>, vector<1x16x16xf32>
    "tpu.trace_start"() <{level = 10 : i32, message = "bij,bjf->bif"}> : () -> ()
    %cst = arith.constant dense<0.000000e+00> : vector<1x16x8xf32>
    %2 = tpu.matmul %1, %0, %cst {dimension_numbers = #tpu.dot_dimension_numbers<[2], [1], [1], [2], [0, 0, 0, 1, 1, 2], [0], [0]>} : vector<1x16x16xf32>, vector<1x16x8xf32>, vector<1x16x8xf32> -> vector<1x16x8xf32>
    "tpu.trace_stop"() : () -> ()
    %3 = vector.shape_cast %2 : vector<1x16x8xf32> to vector<16x8xf32>
    %c0_5 = arith.constant 0 : index
    %c0_6 = arith.constant 0 : index
    %4 = vector.load %arg3[%c0_5, %c0_6] : memref<8x32xf32, #tpu.memory_space<vmem>>, vector<8x32xf32>
    %cst_7 = arith.constant dense<0.000000e+00> : vector<16x32xf32>
    %5 = tpu.matmul %3, %4, %cst_7 {dimension_numbers = #tpu.dot_dimension_numbers<[1], [0], [0], [1], [0, 0, 1, 1], [], []>} : vector<16x8xf32>, vector<8x32xf32>, vector<16x32xf32> -> vector<16x32xf32>
    %c0_8 = arith.constant 0 : index
    %c0_9 = arith.constant 0 : index
    %6 = vector.load %arg4[%c0_8, %c0_9] : memref<1x32xf32, #tpu.memory_space<vmem>>, vector<1x32xf32>
    %7 = vector.broadcast %6 : vector<1x32xf32> to vector<16x32xf32>
    %8 = arith.addf %5, %7 : vector<16x32xf32>
    %cst_10 = arith.constant 0.000000e+00 : f32
    %9 = vector.broadcast %cst_10 : f32 to vector<16x32xf32>
    %10 = arith.maximumf %8, %9 : vector<16x32xf32>
    %c0_11 = arith.constant 0 : index
    %c0_12 = arith.constant 0 : index
    %11 = vector.load %arg5[%c0_11, %c0_12] : memref<32x32xf32, #tpu.memory_space<vmem>>, vector<32x32xf32>
    %cst_13 = arith.constant dense<0.000000e+00> : vector<16x32xf32>
    %12 = tpu.matmul %10, %11, %cst_13 {dimension_numbers = #tpu.dot_dimension_numbers<[1], [0], [0], [1], [0, 0, 1, 1], [], []>} : vector<16x32xf32>, vector<32x32xf32>, vector<16x32xf32> -> vector<16x32xf32>
    %13 = vector.shape_cast %12 : vector<16x32xf32> to vector<1x16x32xf32>
    "tpu.trace_start"() <{level = 10 : i32, message = "bij,bjh->bih"}> : () -> ()
    %cst_14 = arith.constant dense<0.000000e+00> : vector<1x16x32xf32>
    %14 = tpu.matmul %1, %13, %cst_14 {dimension_numbers = #tpu.dot_dimension_numbers<[2], [1], [1], [2], [0, 0, 0, 1, 1, 2], [0], [0]>} : vector<1x16x16xf32>, vector<1x16x32xf32>, vector<1x16x32xf32> -> vector<1x16x32xf32>
    "tpu.trace_stop"() : () -> ()
    %c0_15 = arith.constant 0 : index
    %c0_16 = arith.constant 0 : index
    %15 = vector.load %arg6[%c0_15, %c0_16] : memref<1x32xf32, #tpu.memory_space<vmem>>, vector<1x32xf32>
    %16 = vector.shape_cast %15 : vector<1x32xf32> to vector<1x1x32xf32>
    %17 = vector.broadcast %16 : vector<1x1x32xf32> to vector<1x16x32xf32>
    %18 = arith.addf %14, %17 : vector<1x16x32xf32>
    %cst_17 = arith.constant 0.000000e+00 : f32
    %19 = vector.broadcast %cst_17 : f32 to vector<1x16x32xf32>
    %20 = arith.maximumf %18, %19 : vector<1x16x32xf32>
    %21 = vector.shape_cast %20 : vector<1x16x32xf32> to vector<16x32xf32>
    %c0_18 = arith.constant 0 : index
    %c0_19 = arith.constant 0 : index
    %22 = vector.load %arg7[%c0_18, %c0_19] : memref<32x34xf32, #tpu.memory_space<vmem>>, vector<32x34xf32>
    %cst_20 = arith.constant dense<0.000000e+00> : vector<16x34xf32>
    %23 = tpu.matmul %21, %22, %cst_20 {dimension_numbers = #tpu.dot_dimension_numbers<[1], [0], [0], [1], [0, 0, 1, 1], [], []>} : vector<16x32xf32>, vector<32x34xf32>, vector<16x34xf32> -> vector<16x34xf32>
    %c0_21 = arith.constant 0 : index
    %c0_22 = arith.constant 0 : index
    %24 = vector.load %arg8[%c0_21, %c0_22] : memref<1x34xf32, #tpu.memory_space<vmem>>, vector<1x34xf32>
    %25 = vector.broadcast %24 : vector<1x34xf32> to vector<16x34xf32>
    %26 = arith.addf %23, %25 : vector<16x34xf32>
    %27 = vector.shape_cast %26 : vector<16x34xf32> to vector<1x16x34xf32>
    %c0_23 = arith.constant 0 : index
    %c0_24 = arith.constant 0 : index
    %c0_25 = arith.constant 0 : index
    %28 = vector.load %arg9[%c0_23, %c0_24, %c0_25] : memref<1x16x34xf32, #tpu.memory_space<vmem>>, vector<1x16x34xf32>
    tpu.vector_store %arg9[%c0_23, %c0_24, %c0_25], %27 {strides = array<i32>} : memref<1x16x34xf32, #tpu.memory_space<vmem>>, vector<1x16x34xf32>,
    return
  }
  func.func @transform_0(%arg0: i32) -> (i32, i32, i32) {
    %c0_i32 = arith.constant 0 : i32
    %c0_i32_0 = arith.constant 0 : i32
    %c0_i32_1 = arith.constant 0 : i32
    return %arg0, %c0_i32, %c0_i32_0 : i32, i32, i32
  }
  func.func @transform_1(%arg0: i32) -> (i32, i32, i32) {
    %c0_i32 = arith.constant 0 : i32
    %c0_i32_0 = arith.constant 0 : i32
    %c0_i32_1 = arith.constant 0 : i32
    return %arg0, %c0_i32, %c0_i32_0 : i32, i32, i32
  }
  func.func @transform_2(%arg0: i32) -> (i32, i32) {
    %c0_i32 = arith.constant 0 : i32
    %c0_i32_0 = arith.constant 0 : i32
    %c0_i32_1 = arith.constant 0 : i32
    return %c0_i32, %c0_i32_0 : i32, i32
  }
  func.func @transform_3(%arg0: i32) -> (i32, i32) {
    %c0_i32 = arith.constant 0 : i32
    %c0_i32_0 = arith.constant 0 : i32
    %c0_i32_1 = arith.constant 0 : i32
    return %c0_i32, %c0_i32_0 : i32, i32
  }
  func.func @transform_4(%arg0: i32) -> (i32, i32) {
    %c0_i32 = arith.constant 0 : i32
    %c0_i32_0 = arith.constant 0 : i32
    %c0_i32_1 = arith.constant 0 : i32
    return %c0_i32, %c0_i32_0 : i32, i32
  }
  func.func @transform_5(%arg0: i32) -> (i32, i32) {
    %c0_i32 = arith.constant 0 : i32
    %c0_i32_0 = arith.constant 0 : i32
    %c0_i32_1 = arith.constant 0 : i32
    return %c0_i32, %c0_i32_0 : i32, i32
  }
  func.func @transform_6(%arg0: i32) -> (i32, i32) {
    %c0_i32 = arith.constant 0 : i32
    %c0_i32_0 = arith.constant 0 : i32
    %c0_i32_1 = arith.constant 0 : i32
    return %c0_i32, %c0_i32_0 : i32, i32
  }
  func.func @transform_7(%arg0: i32) -> (i32, i32) {
    %c0_i32 = arith.constant 0 : i32
    %c0_i32_0 = arith.constant 0 : i32
    %c0_i32_1 = arith.constant 0 : i32
    return %c0_i32, %c0_i32_0 : i32, i32
  }
  func.func @transform_8(%arg0: i32) -> (i32, i32, i32) {
    %c0_i32 = arith.constant 0 : i32
    %c0_i32_0 = arith.constant 0 : i32
    %c0_i32_1 = arith.constant 0 : i32
    return %arg0, %c0_i32, %c0_i32_0 : i32, i32, i32
  }
}

</mosaic_0001>

<llo_original>
// kernel: tpu_custom_call.1
$region0: #{tpu_custom_call.1}
  #allocation0 [shape = 'u32[]', space=smem, size = 0x4, offset = 0x4, fixed_abs, tag = 'smem constant byte address 0x4 - core index']
  #allocation1 [shape = 'u32[144,128]{1,0:T(1,128)}', space=vmem, size = 0x12000, scoped, tag = 'internal scratch']
  %s0 = inlined_call_operand.vmem [shape: f32[2,16,8], index: 0, kind: input, shape index: {}]
  %s1 = inlined_call_operand.vmem [shape: f32[2,16,16], index: 1, kind: input, shape index: {}]
  %s2 = inlined_call_operand.hbm [shape: f32[8,32], index: 2, kind: input, shape index: {}]
  %s3 = inlined_call_operand.vmem [shape: f32[1,32], index: 3, kind: input, shape index: {}]
  %s4 = inlined_call_operand.hbm [shape: f32[32,32], index: 4, kind: input, shape index: {}]
  %s5 = inlined_call_operand.vmem [shape: f32[1,32], index: 5, kind: input, shape index: {}]
  %s6 = inlined_call_operand.vmem [shape: f32[32,34], index: 6, kind: input, shape index: {}]
  %s7 = inlined_call_operand.vmem [shape: f32[1,34], index: 7, kind: input, shape index: {}]
  %s8 = inlined_call_operand.hbm [shape: f32[2,16,34], index: 8, kind: output, shape index: {}]
  %s9 = sld [smem:[#allocation0]]
  $region73: #{tpu_custom_call.1} parent=0
    _
  %s11 = ssub.s32 1, %s9
  %s12 = scalar_select 0, %s11, %s9
  $region1: #{tpu_custom_call.1} parent=0
    #allocation2 [shape = 'u8[4096]{0}', space=vmem, size = 0x1000, scoped, tag = 'input window, operand 2, single buffered']
    #allocation3 [shape = 's32[2]{0}', space=sflag, size = 0x8, scoped, tag = 'scoped memory for tpu_custom_call.1']
    #allocation4 [shape = 's32[2]{0}', space=sflag, size = 0x8, scoped, tag = 'scoped memory for tpu_custom_call.1']
    #allocation5 [shape = 'u8[16384]{0}', space=vmem, size = 0x4000, scoped, tag = 'input window, operand 4, single buffered']
    #allocation6 [shape = 's32[1]{0}', space=sflag, size = 0x4, scoped, tag = 'scoped memory for tpu_custom_call.1']
    #allocation7 [shape = 'u8[16384]{0}', space=vmem, size = 0x4000, scoped, tag = 'output window, operand 0']
    %13 = vsyncpa [#allocation3], 0
    %14 = vsyncpa [#allocation6], 0
    %15 = vsyncpa [#allocation4], 0
    %s16 = scalar_lea.sflag [#allocation4], 1
    %17 = vsyncpa %s16, 0
    loop: start=0, step=1, limit=4
    $region2: #{tpu_custom_call.1} parent=1 // loop_pre_header
      _
    $region3: #{tpu_custom_call.1} parent=1 // loop_header
      %s19 = sphi 0, %s23
      %p20 = scmp.ge.s32.totalorder %s19, 4
      %s29 = sphi 0, %s31
      %s32 = sphi 0, %s29
      %s33 = sphi 0, %s32
      %s49 = sphi 0, %s33
      %s55 = sphi 0, %s57
      %s58 = sphi 0, %s55
      %s59 = sphi 0, %s58
      %s75 = sphi 0, %s59
      %s79 = sphi 0, %s79
      %s81 = sphi 0, %s79
      %s82 = sphi 0, %s81
      %s96 = sphi 0, %s82
      %s100 = sphi 0, %s100
      %s102 = sphi 0, %s100
      %s103 = sphi 0, %s102
      %s117 = sphi 0, %s103
      %s121 = sphi 0, %s121
      %s123 = sphi 0, %s121
      %s124 = sphi 0, %s123
      %s138 = sphi 0, %s124
      %s142 = sphi 0, %s142
      %s144 = sphi 0, %s142
      %s145 = sphi 0, %s144
      %s159 = sphi 0, %s145
      %s163 = sphi 0, %s163
      %s165 = sphi 0, %s163
      %s166 = sphi 0, %s165
      %s180 = sphi 0, %s166
      %s184 = sphi 0, %s184
      %s186 = sphi 0, %s184
      %s187 = sphi 0, %s186
      %s201 = sphi 0, %s187
      %s207 = sphi 0, %s209
      %s210 = sphi 0, %s207
      %s211 = sphi 0, %s210
      %s227 = sphi 0, %s211
    $region4: #{tpu_custom_call.1} parent=1 // loop_header_branch
      %22 = sbr.rel (%p20) target = $region8
    $region5: #{tpu_custom_call.1} parent=1 // loop_body
      %s24 = ssub.s32 %s19, 1
      %s25 = ssub.s32 %s19, 2
      %s26 = sadd.s32 %s19, 1
      %s27 = ssub.s32 %s19, %s26
      %p28 = scmp.eq.s32.totalorder %s27, 0
      %s30 = sadd.s32 %s29, 1
      %s31 = scalar_select %p28, %s29, %s30
      %p34 = pneg %p28
      %p35 = scmp.eq.s32.totalorder %s19, 1
      %p36 = por %p34, %p35
      %p37 = scmp.ne.s32.totalorder %s29, %s32
      %p38 = scmp.eq.s32.totalorder %s19, 0
      %p39 = por %p37, %p38
      %p40 = scmp.ne.s32.totalorder %s29, %s32
      %p41 = scmp.eq.s32.totalorder %s24, 1
      %p42 = por %p40, %p41
      %p43 = scmp.ne.s32.totalorder %s32, %s33
      %p44 = scmp.eq.s32.totalorder %s24, 0
      %p45 = por %p43, %p44
      %p46 = scmp.ne.s32.totalorder %s32, %s33
      %p47 = scmp.eq.s32.totalorder %s25, 1
      %p48 = por %p46, %p47
      %p50 = scmp.ne.s32.totalorder %s33, %s49
      %p51 = scmp.eq.s32.totalorder %s25, 0
      %p52 = por %p50, %p51
      %s53 = ssub.s32 %s19, %s26
      %p54 = scmp.eq.s32.totalorder %s53, 0
      %s56 = sadd.s32 %s55, 1
      %s57 = scalar_select %p54, %s55, %s56
      %p60 = pneg %p54
      %p61 = scmp.eq.s32.totalorder %s19, 1
      %p62 = por %p60, %p61
      %p63 = scmp.ne.s32.totalorder %s55, %s58
      %p64 = scmp.eq.s32.totalorder %s19, 0
      %p65 = por %p63, %p64
      %p66 = scmp.ne.s32.totalorder %s55, %s58
      %p67 = scmp.eq.s32.totalorder %s24, 1
      %p68 = por %p66, %p67
      %p69 = scmp.ne.s32.totalorder %s58, %s59
      %p70 = scmp.eq.s32.totalorder %s24, 0
      %p71 = por %p69, %p70
      %p72 = scmp.ne.s32.totalorder %s58, %s59
      %p73 = scmp.eq.s32.totalorder %s25, 1
      %p74 = por %p72, %p73
      %p76 = scmp.ne.s32.totalorder %s59, %s75
      %p77 = scmp.eq.s32.totalorder %s25, 0
      %p78 = por %p76, %p77
      %s80 = sadd.s32 %s79, 1
      %p83 = scmp.eq.s32.totalorder %s19, 1
      %p84 = scmp.ne.s32.totalorder %s79, %s81
      %p85 = scmp.eq.s32.totalorder %s19, 0
      %p86 = por %p84, %p85
      %p87 = scmp.ne.s32.totalorder %s79, %s81
      %p88 = scmp.eq.s32.totalorder %s24, 1
      %p89 = por %p87, %p88
      %p90 = scmp.ne.s32.totalorder %s81, %s82
      %p91 = scmp.eq.s32.totalorder %s24, 0
      %p92 = por %p90, %p91
      %p93 = scmp.ne.s32.totalorder %s81, %s82
      %p94 = scmp.eq.s32.totalorder %s25, 1
      %p95 = por %p93, %p94
      %p97 = scmp.ne.s32.totalorder %s82, %s96
      %p98 = scmp.eq.s32.totalorder %s25, 0
      %p99 = por %p97, %p98
      %s101 = sadd.s32 %s100, 1
      %p104 = scmp.eq.s32.totalorder %s19, 1
      %p105 = scmp.ne.s32.totalorder %s100, %s102
      %p106 = scmp.eq.s32.totalorder %s19, 0
      %p107 = por %p105, %p106
      %p108 = scmp.ne.s32.totalorder %s100, %s102
      %p109 = scmp.eq.s32.totalorder %s24, 1
      %p110 = por %p108, %p109
      %p111 = scmp.ne.s32.totalorder %s102, %s103
      %p112 = scmp.eq.s32.totalorder %s24, 0
      %p113 = por %p111, %p112
      %p114 = scmp.ne.s32.totalorder %s102, %s103
      %p115 = scmp.eq.s32.totalorder %s25, 1
      %p116 = por %p114, %p115
      %p118 = scmp.ne.s32.totalorder %s103, %s117
      %p119 = scmp.eq.s32.totalorder %s25, 0
      %p120 = por %p118, %p119
      %s122 = sadd.s32 %s121, 1
      %p125 = scmp.eq.s32.totalorder %s19, 1
      %p126 = scmp.ne.s32.totalorder %s121, %s123
      %p127 = scmp.eq.s32.totalorder %s19, 0
      %p128 = por %p126, %p127
      %p129 = scmp.ne.s32.totalorder %s121, %s123
      %p130 = scmp.eq.s32.totalorder %s24, 1
      %p131 = por %p129, %p130
      %p132 = scmp.ne.s32.totalorder %s123, %s124
      %p133 = scmp.eq.s32.totalorder %s24, 0
      %p134 = por %p132, %p133
      %p135 = scmp.ne.s32.totalorder %s123, %s124
      %p136 = scmp.eq.s32.totalorder %s25, 1
      %p137 = por %p135, %p136
      %p139 = scmp.ne.s32.totalorder %s124, %s138
      %p140 = scmp.eq.s32.totalorder %s25, 0
      %p141 = por %p139, %p140
      %s143 = sadd.s32 %s142, 1
      %p146 = scmp.eq.s32.totalorder %s19, 1
      %p147 = scmp.ne.s32.totalorder %s142, %s144
      %p148 = scmp.eq.s32.totalorder %s19, 0
      %p149 = por %p147, %p148
      %p150 = scmp.ne.s32.totalorder %s142, %s144
      %p151 = scmp.eq.s32.totalorder %s24, 1
      %p152 = por %p150, %p151
      %p153 = scmp.ne.s32.totalorder %s144, %s145
      %p154 = scmp.eq.s32.totalorder %s24, 0
      %p155 = por %p153, %p154
      %p156 = scmp.ne.s32.totalorder %s144, %s145
      %p157 = scmp.eq.s32.totalorder %s25, 1
      %p158 = por %p156, %p157
      %p160 = scmp.ne.s32.totalorder %s145, %s159
      %p161 = scmp.eq.s32.totalorder %s25, 0
      %p162 = por %p160, %p161
      %s164 = sadd.s32 %s163, 1
      %p167 = scmp.eq.s32.totalorder %s19, 1
      %p168 = scmp.ne.s32.totalorder %s163, %s165
      %p169 = scmp.eq.s32.totalorder %s19, 0
      %p170 = por %p168, %p169
      %p171 = scmp.ne.s32.totalorder %s163, %s165
      %p172 = scmp.eq.s32.totalorder %s24, 1
      %p173 = por %p171, %p172
      %p174 = scmp.ne.s32.totalorder %s165, %s166
      %p175 = scmp.eq.s32.totalorder %s24, 0
      %p176 = por %p174, %p175
      %p177 = scmp.ne.s32.totalorder %s165, %s166
      %p178 = scmp.eq.s32.totalorder %s25, 1
      %p179 = por %p177, %p178
      %p181 = scmp.ne.s32.totalorder %s166, %s180
      %p182 = scmp.eq.s32.totalorder %s25, 0
      %p183 = por %p181, %p182
      %s185 = sadd.s32 %s184, 1
      %p188 = scmp.eq.s32.totalorder %s19, 1
      %p189 = scmp.ne.s32.totalorder %s184, %s186
      %p190 = scmp.eq.s32.totalorder %s19, 0
      %p191 = por %p189, %p190
      %p192 = scmp.ne.s32.totalorder %s184, %s186
      %p193 = scmp.eq.s32.totalorder %s24, 1
      %p194 = por %p192, %p193
      %p195 = scmp.ne.s32.totalorder %s186, %s187
      %p196 = scmp.eq.s32.totalorder %s24, 0
      %p197 = por %p195, %p196
      %p198 = scmp.ne.s32.totalorder %s186, %s187
      %p199 = scmp.eq.s32.totalorder %s25, 1
      %p200 = por %p198, %p199
      %p202 = scmp.ne.s32.totalorder %s187, %s201
      %p203 = scmp.eq.s32.totalorder %s25, 0
      %p204 = por %p202, %p203
      %s205 = ssub.s32 %s19, %s26
      %p206 = scmp.eq.s32.totalorder %s205, 0
      %s208 = sadd.s32 %s207, 1
      %s209 = scalar_select %p206, %s207, %s208
      %p212 = pneg %p206
      %p213 = scmp.eq.s32.totalorder %s19, 1
      %p214 = por %p212, %p213
      %p215 = scmp.ne.s32.totalorder %s207, %s210
      %p216 = scmp.eq.s32.totalorder %s19, 0
      %p217 = por %p215, %p216
      %p218 = scmp.ne.s32.totalorder %s207, %s210
      %p219 = scmp.eq.s32.totalorder %s24, 1
      %p220 = por %p218, %p219
      %p221 = scmp.ne.s32.totalorder %s210, %s211
      %p222 = scmp.eq.s32.totalorder %s24, 0
      %p223 = por %p221, %p222
      %p224 = scmp.ne.s32.totalorder %s210, %s211
      %p225 = scmp.eq.s32.totalorder %s25, 1
      %p226 = por %p224, %p225
      %p228 = scmp.ne.s32.totalorder %s211, %s227
      %p229 = scmp.eq.s32.totalorder %s25, 0
      %p230 = por %p228, %p229
      %p231 = scmp.le.s32.totalorder 1, %s19
      %p232 = scmp.lt.s32.totalorder %s19, 3
      %p233 = pnand %p231, %p232
      %p234 = pneg %p233
      // Predicated region
      $region9: #{tpu_custom_call.1} parent=5 // pred_check
        _
      $region10: #{tpu_custom_call.1} parent=5 // pred_check_branch
        %236 = sbr.rel (%p233) target = $region12
      $region11: #{tpu_custom_call.1} parent=5 // pred_region
        %s237 = ssub.s32 %s19, 1
        // Predicated region
        $region13: #{tpu_custom_call.1} parent=11 // pred_check
          %p238 = pneg %p92
        $region14: #{tpu_custom_call.1} parent=11 // pred_check_branch
          %240 = sbr.rel (%p238) target = $region16
        $region15: #{tpu_custom_call.1} parent=11 // pred_region
          %s242 = ssub.s32 128, 128
          %243 = vsyncadd [#allocation3], %s242
          %s245 = sshll.u32 [#allocation2], 4
          %s246 = int_to_ptr.vmem [resolvable:$true] %s245
          %248 = dma.hbm_to_vmem [thread:$0]  %s2, 128, %s246, [#allocation3]
        $region16: #{tpu_custom_call.1} parent=11 // pred_fallthru
          _
        // Predicated region
        $region17: #{tpu_custom_call.1} parent=11 // pred_check
          %p249 = pneg %p113
        $region18: #{tpu_custom_call.1} parent=11 // pred_check_branch
          %251 = sbr.rel (%p249) target = $region20
        $region19: #{tpu_custom_call.1} parent=11 // pred_region
          _
        $region20: #{tpu_custom_call.1} parent=11 // pred_fallthru
          _
        // Predicated region
        $region21: #{tpu_custom_call.1} parent=11 // pred_check
          %p252 = pneg %p134
        $region22: #{tpu_custom_call.1} parent=11 // pred_check_branch
          %254 = sbr.rel (%p252) target = $region24
        $region23: #{tpu_custom_call.1} parent=11 // pred_region
          %s256 = ssub.s32 512, 512
          %257 = vsyncadd [#allocation6], %s256
          %s258 = sshll.u32 [#allocation5], 4
          %s259 = int_to_ptr.vmem [resolvable:$true] %s258
          %264 = dma.hbm_to_vmem [thread:$0]  %s4, 512, %s259, [#allocation6], 128, 128, 8
        $region24: #{tpu_custom_call.1} parent=11 // pred_fallthru
          _
        // Predicated region
        $region25: #{tpu_custom_call.1} parent=11 // pred_check
          %p265 = pneg %p155
        $region26: #{tpu_custom_call.1} parent=11 // pred_check_branch
          %267 = sbr.rel (%p265) target = $region28
        $region27: #{tpu_custom_call.1} parent=11 // pred_region
          _
        $region28: #{tpu_custom_call.1} parent=11 // pred_fallthru
          _
        // Predicated region
        $region29: #{tpu_custom_call.1} parent=11 // pred_check
          %p268 = pneg %p176
        $region30: #{tpu_custom_call.1} parent=11 // pred_check_branch
          %270 = sbr.rel (%p268) target = $region32
        $region31: #{tpu_custom_call.1} parent=11 // pred_region
          _
        $region32: #{tpu_custom_call.1} parent=11 // pred_fallthru
          _
        // Predicated region
        $region33: #{tpu_custom_call.1} parent=11 // pred_check
          %p271 = pneg %p197
        $region34: #{tpu_custom_call.1} parent=11 // pred_check_branch
          %273 = sbr.rel (%p271) target = $region36
        $region35: #{tpu_custom_call.1} parent=11 // pred_region
          _
        $region36: #{tpu_custom_call.1} parent=11 // pred_fallthru
          _
      $region12: #{tpu_custom_call.1} parent=5 // pred_fallthru
        _
      %p274 = scmp.lt.s32.totalorder %s19, 2
      // Predicated region
      $region37: #{tpu_custom_call.1} parent=5 // pred_check
        %p275 = pneg %p274
      $region38: #{tpu_custom_call.1} parent=5 // pred_check_branch
        %277 = sbr.rel (%p275) target = $region40
      $region39: #{tpu_custom_call.1} parent=5 // pred_region
        // Predicated region
        $region41: #{tpu_custom_call.1} parent=39 // pred_check
          %p278 = pneg %p39
        $region42: #{tpu_custom_call.1} parent=39 // pred_check_branch
          %280 = sbr.rel (%p278) target = $region44
        $region43: #{tpu_custom_call.1} parent=39 // pred_region
          %p281 = scmp.lt.s32.totalorder %s19, 1
          %s282 = scalar_select %p281, %s19, 1
          %s283 = smul.addr %s282, 2
          %s284 = smul.addr %s283, 8
          %s285 = scalar_lea.vmem %s0, %s284
        $region44: #{tpu_custom_call.1} parent=39 // pred_fallthru
          _
        // Predicated region
        $region45: #{tpu_custom_call.1} parent=39 // pred_check
          %p286 = pneg %p65
        $region46: #{tpu_custom_call.1} parent=39 // pred_check_branch
          %288 = sbr.rel (%p286) target = $region48
        $region47: #{tpu_custom_call.1} parent=39 // pred_region
          %p289 = scmp.lt.s32.totalorder %s19, 1
          %s290 = scalar_select %p289, %s19, 1
          %s291 = smul.addr %s290, 2
          %s292 = smul.addr %s291, 8
          %s293 = scalar_lea.vmem %s1, %s292
        $region48: #{tpu_custom_call.1} parent=39 // pred_fallthru
          _
      $region40: #{tpu_custom_call.1} parent=5 // pred_fallthru
        _
      %p294 = scmp.le.s32.totalorder 1, %s19
      %p295 = scmp.lt.s32.totalorder %s19, 3
      %p296 = pnand %p294, %p295
      %p297 = pneg %p296
      // Predicated region
      $region49: #{tpu_custom_call.1} parent=5 // pred_check
        _
      $region50: #{tpu_custom_call.1} parent=5 // pred_check_branch
        %299 = sbr.rel (%p296) target = $region52
      $region51: #{tpu_custom_call.1} parent=5 // pred_region
        %s300 = ssub.s32 %s19, 1
        // Predicated region
        $region53: #{tpu_custom_call.1} parent=51 // pred_check
          %p301 = pneg %p92
        $region54: #{tpu_custom_call.1} parent=51 // pred_check_branch
          %303 = sbr.rel (%p301) target = $region56
        $region55: #{tpu_custom_call.1} parent=51 // pred_region
          %304 = dma.done [#allocation3], 128
        $region56: #{tpu_custom_call.1} parent=51 // pred_fallthru
          _
        // Predicated region
        $region57: #{tpu_custom_call.1} parent=51 // pred_check
          %p305 = pneg %p134
        $region58: #{tpu_custom_call.1} parent=51 // pred_check_branch
          %307 = sbr.rel (%p305) target = $region60
        $region59: #{tpu_custom_call.1} parent=51 // pred_region
          %308 = dma.done [#allocation6], 512
        $region60: #{tpu_custom_call.1} parent=51 // pred_fallthru
          _
        %p309 = scmp.lt.s32.totalorder %s24, 1
        %s310 = scalar_select %p309, %s24, 1
        %s311 = smul.addr %s310, 2
        %s312 = smul.addr %s311, 8
        %s313 = scalar_lea.vmem %s0, %s312
        %p314 = pneg %p45
        %p315 = pneg %p42
        %p316 = scmp.lt.s32.totalorder %s24, 1
        %s317 = scalar_select %p316, %s24, 1
        %s318 = smul.addr %s317, 2
        %s319 = smul.addr %s318, 8
        %s320 = scalar_lea.vmem %s1, %s319
        %p321 = pneg %p71
        %p322 = pneg %p68
        %p323 = pneg %p92
        %p324 = pneg %p89
        %p325 = pneg %p113
        %p326 = pneg %p110
        %p327 = pneg %p134
        %p328 = pneg %p131
        %p329 = pneg %p155
        %p330 = pneg %p152
        %p331 = pneg %p176
        %p332 = pneg %p173
        %p333 = pneg %p197
        %p334 = pneg %p194
        %p335 = pneg %p223
        %p336 = pneg %p220
        %s337 = sand.u32 %s210, 1
        %s338 = scalar_lea.sflag [#allocation4], %s337
        %s339 = sand.u32 %s210, 1
        %s340 = smul.addr %s339, 16
        %s341 = scalar_lea.vmem [#allocation7], %s340
        %p342 = scmp.lt.s32.totalorder %s24, 1
        %s343 = scalar_select %p342, %s24, 1
        %s344 = smul.addr %s343, 2
        %s345 = smul.addr %s344, 8
        %s346 = scalar_lea.vmem %s0, %s345
        %p347 = scmp.lt.s32.totalorder %s24, 1
        %s348 = scalar_select %p347, %s24, 1
        %s349 = smul.addr %s348, 2
        %s350 = smul.addr %s349, 8
        %s351 = scalar_lea.vmem %s1, %s350
        %v352 = vld [vmem:[%s346] sm:$0xff]
        %v353 = vld [vmem:[%s346 + $0x8] sm:$0xff]
        %v354 = vld [vmem:[%s351] sm:$0xff]
        %v355 = vld [vmem:[%s351 + $0x8] sm:$0xff]
        %vm356 = vcmask 130048
        %v358 = vsel %vm356, %v354, 0
        %v361 = vsel %vm356, %v355, 0
        %363 = vmatprep.subr.mxu0 0.0
        %364 = vmatpush1.msra.mxu0 %v352
        %365 = vmatprep.subr.mxu0 0.0
        %366 = vmatpush1.msra.mxu0 %v353
        %367 = vmatprep.subr.mxu0 0.0
        %368 = vmatpush1.msra.mxu0 0.0
        %369 = vmatprep.subr.mxu0 0.0
        %370 = vmatpush1.msra.mxu0 0.0
        %371 = vmatprep.subr.mxu0 0.0
        %372 = vmatpush1.msra.mxu0 0.0
        %373 = vmatprep.subr.mxu0 0.0
        %374 = vmatpush1.msra.mxu0 0.0
        %375 = vmatprep.subr.mxu0 0.0
        %376 = vmatpush1.msra.mxu0 0.0
        %377 = vmatprep.subr.mxu0 0.0
        %378 = vmatpush1.msra.mxu0 0.0
        %379 = vmatprep.subr.mxu0 0.0
        %380 = vmatpush1.msra.mxu0 0.0
        %381 = vmatprep.subr.mxu0 0.0
        %382 = vmatpush1.msra.mxu0 0.0
        %383 = vmatprep.subr.mxu0 0.0
        %384 = vmatpush1.msra.mxu0 0.0
        %385 = vmatprep.subr.mxu0 0.0
        %386 = vmatpush1.msra.mxu0 0.0
        %387 = vmatprep.subr.mxu0 0.0
        %388 = vmatpush1.msra.mxu0 0.0
        %389 = vmatprep.subr.mxu0 0.0
        %390 = vmatpush1.msra.mxu0 0.0
        %391 = vmatprep.subr.mxu0 0.0
        %392 = vmatpush1.msra.mxu0 0.0
        %393 = vmatprep.subr.mxu0 0.0
        %394 = vmatpush1.msra.mxu0 0.0
        %395 = vmatprep.subr.mxu0 0.0
        %396 = vmatpush1.msra.mxu0 0.0
        %397 = vmatprep.subr.mxu0 0.0
        %398 = vmatpush1.msra.mxu0 0.0
        %399 = vmatprep.subr.mxu0 0.0
        %400 = vmatpush1.msra.mxu0 0.0
        %401 = vmatprep.subr.mxu0 0.0
        %402 = vmatpush1.msra.mxu0 0.0
        %403 = vmatprep.subr.mxu0 0.0
        %404 = vmatpush1.msra.mxu0 0.0
        %405 = vmatprep.subr.mxu0 0.0
        %406 = vmatpush1.msra.mxu0 0.0
        %407 = vmatprep.subr.mxu0 0.0
        %408 = vmatpush1.msra.mxu0 0.0
        %409 = vmatprep.subr.mxu0 0.0
        %410 = vmatpush1.msra.mxu0 0.0
        %411 = vmatprep.subr.mxu0 0.0
        %412 = vmatpush1.msra.mxu0 0.0
        %413 = vmatprep.subr.mxu0 0.0
        %414 = vmatpush1.msra.mxu0 0.0
        %415 = vmatprep.subr.mxu0 0.0
        %416 = vmatpush1.msra.mxu0 0.0
        %417 = vmatprep.subr.mxu0 0.0
        %418 = vmatpush1.msra.mxu0 0.0
        %419 = vmatprep.subr.mxu0 0.0
        %420 = vmatpush1.msra.mxu0 0.0
        %421 = vmatprep.subr.mxu0 0.0
        %422 = vmatpush1.msra.mxu0 0.0
        %423 = vmatprep.subr.mxu0 0.0
        %424 = vmatpush1.msra.mxu0 0.0
        %425 = vmatprep.subr.mxu0 0.0
        %426 = vmatpush1.msra.mxu0 0.0
        %427 = vmatprep.mubr.f32.mxu0 0.0
        %428 = vmatmul.mubr.f32.gmra.mrb[0].mxu0 %v358
        %v429 = vpop.f32.mrb[0].mxu0
        %v430 = vadd.f32 0.0, %v429
        %v431 = vpop.f32.mrb[0].mxu0
        %432 = vmatprep.mubr.f32.mxu0 0.0
        %433 = vmatmul.mubr.f32.gmra.mrb[0].mxu0 %v361
        %v434 = vpop.f32.mrb[0].mxu0
        %v435 = vadd.f32 0.0, %v434
        %v436 = vpop.f32.mrb[0].mxu0
        %437 = vdwg.mxu0
        %v438 = vld [vmem:[#allocation2] sm:$0xff]
        %v439 = vld [vmem:[%s3] sm:$0x1]
        %v441 = vlaneseq
        %v442 = vshrl.u32 %v441, 7
        %v443 = vsub.s32 0, %v442
        %v444 = vrot.slane %v439, %v443
        %vm446 = vcmask 64512
        %v448 = vsel %vm446, %v430, 0
        %v451 = vsel %vm446, %v435, 0
        %453 = vmatprep.subr.mxu0 0.0
        %454 = vmatpush1.msra.mxu0 %v438
        %455 = vmatprep.subr.mxu0 0.0
        %456 = vmatpush1.msra.mxu0 0.0
        %457 = vmatprep.subr.mxu0 0.0
        %458 = vmatpush1.msra.mxu0 0.0
        %459 = vmatprep.subr.mxu0 0.0
        %460 = vmatpush1.msra.mxu0 0.0
        %461 = vmatprep.subr.mxu0 0.0
        %462 = vmatpush1.msra.mxu0 0.0
        %463 = vmatprep.subr.mxu0 0.0
        %464 = vmatpush1.msra.mxu0 0.0
        %465 = vmatprep.subr.mxu0 0.0
        %466 = vmatpush1.msra.mxu0 0.0
        %467 = vmatprep.subr.mxu0 0.0
        %468 = vmatpush1.msra.mxu0 0.0
        %469 = vmatprep.subr.mxu0 0.0
        %470 = vmatpush1.msra.mxu0 0.0
        %471 = vmatprep.subr.mxu0 0.0
        %472 = vmatpush1.msra.mxu0 0.0
        %473 = vmatprep.subr.mxu0 0.0
        %474 = vmatpush1.msra.mxu0 0.0
        %475 = vmatprep.subr.mxu0 0.0
        %476 = vmatpush1.msra.mxu0 0.0
        %477 = vmatprep.subr.mxu0 0.0
        %478 = vmatpush1.msra.mxu0 0.0
        %479 = vmatprep.subr.mxu0 0.0
        %480 = vmatpush1.msra.mxu0 0.0
        %481 = vmatprep.subr.mxu0 0.0
        %482 = vmatpush1.msra.mxu0 0.0
        %483 = vmatprep.subr.mxu0 0.0
        %484 = vmatpush1.msra.mxu0 0.0
        %485 = vmatprep.subr.mxu0 0.0
        %486 = vmatpush1.msra.mxu0 0.0
        %487 = vmatprep.subr.mxu0 0.0
        %488 = vmatpush1.msra.mxu0 0.0
        %489 = vmatprep.subr.mxu0 0.0
        %490 = vmatpush1.msra.mxu0 0.0
        %491 = vmatprep.subr.mxu0 0.0
        %492 = vmatpush1.msra.mxu0 0.0
        %493 = vmatprep.subr.mxu0 0.0
        %494 = vmatpush1.msra.mxu0 0.0
        %495 = vmatprep.subr.mxu0 0.0
        %496 = vmatpush1.msra.mxu0 0.0
        %497 = vmatprep.subr.mxu0 0.0
        %498 = vmatpush1.msra.mxu0 0.0
        %499 = vmatprep.subr.mxu0 0.0
        %500 = vmatpush1.msra.mxu0 0.0
        %501 = vmatprep.subr.mxu0 0.0
        %502 = vmatpush1.msra.mxu0 0.0
        %503 = vmatprep.subr.mxu0 0.0
        %504 = vmatpush1.msra.mxu0 0.0
        %505 = vmatprep.subr.mxu0 0.0
        %506 = vmatpush1.msra.mxu0 0.0
        %507 = vmatprep.subr.mxu0 0.0
        %508 = vmatpush1.msra.mxu0 0.0
        %509 = vmatprep.subr.mxu0 0.0
        %510 = vmatpush1.msra.mxu0 0.0
        %511 = vmatprep.subr.mxu0 0.0
        %512 = vmatpush1.msra.mxu0 0.0
        %513 = vmatprep.subr.mxu0 0.0
        %514 = vmatpush1.msra.mxu0 0.0
        %515 = vmatprep.subr.mxu0 0.0
        %516 = vmatpush1.msra.mxu0 0.0
        %517 = vmatprep.mubr.f32.mxu0 0.0
        %518 = vmatmul.mubr.f32.gmra.mrb[0].mxu0 %v448
        %v519 = vpop.f32.mrb[0].mxu0
        %v520 = vadd.f32 %v444, %v519
        %v521 = vpop.f32.mrb[0].mxu0
        %522 = vmatprep.mubr.f32.mxu0 0.0
        %523 = vmatmul.mubr.f32.gmra.mrb[0].mxu0 %v451
        %v524 = vpop.f32.mrb[0].mxu0
        %v525 = vadd.f32 %v444, %v524
        %v526 = vpop.f32.mrb[0].mxu0
        %527 = vdwg.mxu0
        %v528 = vmax.f32 %v520, 0.0
        %v529 = vmax.f32 %v525, 0.0
        %v530 = vld [vmem:[#allocation5] sm:$0xff]
        %v531 = vld [vmem:[#allocation5 + $0x8] sm:$0xff]
        %v532 = vld [vmem:[#allocation5 + $0x10] sm:$0xff]
        %v533 = vld [vmem:[#allocation5 + $0x18] sm:$0xff]
        %vm534 = vcmask 261120
        %v536 = vsel %vm534, %v528, 0
        %v539 = vsel %vm534, %v529, 0
        %541 = vmatprep.subr.mxu0 0.0
        %542 = vmatpush1.msra.mxu0 %v530
        %543 = vmatprep.subr.mxu0 0.0
        %544 = vmatpush1.msra.mxu0 %v531
        %545 = vmatprep.subr.mxu0 0.0
        %546 = vmatpush1.msra.mxu0 %v532
        %547 = vmatprep.subr.mxu0 0.0
        %548 = vmatpush1.msra.mxu0 %v533
        %549 = vmatprep.subr.mxu0 0.0
        %550 = vmatpush1.msra.mxu0 0.0
        %551 = vmatprep.subr.mxu0 0.0
        %552 = vmatpush1.msra.mxu0 0.0
        %553 = vmatprep.subr.mxu0 0.0
        %554 = vmatpush1.msra.mxu0 0.0
        %555 = vmatprep.subr.mxu0 0.0
        %556 = vmatpush1.msra.mxu0 0.0
        %557 = vmatprep.subr.mxu0 0.0
        %558 = vmatpush1.msra.mxu0 0.0
        %559 = vmatprep.subr.mxu0 0.0
        %560 = vmatpush1.msra.mxu0 0.0
        %561 = vmatprep.subr.mxu0 0.0
        %562 = vmatpush1.msra.mxu0 0.0
        %563 = vmatprep.subr.mxu0 0.0
        %564 = vmatpush1.msra.mxu0 0.0
        %565 = vmatprep.subr.mxu0 0.0
        %566 = vmatpush1.msra.mxu0 0.0
        %567 = vmatprep.subr.mxu0 0.0
        %568 = vmatpush1.msra.mxu0 0.0
        %569 = vmatprep.subr.mxu0 0.0
        %570 = vmatpush1.msra.mxu0 0.0
        %571 = vmatprep.subr.mxu0 0.0
        %572 = vmatpush1.msra.mxu0 0.0
        %573 = vmatprep.subr.mxu0 0.0
        %574 = vmatpush1.msra.mxu0 0.0
        %575 = vmatprep.subr.mxu0 0.0
        %576 = vmatpush1.msra.mxu0 0.0
        %577 = vmatprep.subr.mxu0 0.0
        %578 = vmatpush1.msra.mxu0 0.0
        %579 = vmatprep.subr.mxu0 0.0
        %580 = vmatpush1.msra.mxu0 0.0
        %581 = vmatprep.subr.mxu0 0.0
        %582 = vmatpush1.msra.mxu0 0.0
        %583 = vmatprep.subr.mxu0 0.0
        %584 = vmatpush1.msra.mxu0 0.0
        %585 = vmatprep.subr.mxu0 0.0
        %586 = vmatpush1.msra.mxu0 0.0
        %587 = vmatprep.subr.mxu0 0.0
        %588 = vmatpush1.msra.mxu0 0.0
        %589 = vmatprep.subr.mxu0 0.0
        %590 = vmatpush1.msra.mxu0 0.0
        %591 = vmatprep.subr.mxu0 0.0
        %592 = vmatpush1.msra.mxu0 0.0
        %593 = vmatprep.subr.mxu0 0.0
        %594 = vmatpush1.msra.mxu0 0.0
        %595 = vmatprep.subr.mxu0 0.0
        %596 = vmatpush1.msra.mxu0 0.0
        %597 = vmatprep.subr.mxu0 0.0
        %598 = vmatpush1.msra.mxu0 0.0
        %599 = vmatprep.subr.mxu0 0.0
        %600 = vmatpush1.msra.mxu0 0.0
        %601 = vmatprep.subr.mxu0 0.0
        %602 = vmatpush1.msra.mxu0 0.0
        %603 = vmatprep.subr.mxu0 0.0
        %604 = vmatpush1.msra.mxu0 0.0
        %605 = vmatprep.mubr.f32.mxu0 0.0
        %606 = vmatmul.mubr.f32.gmra.mrb[0].mxu0 %v536
        %v607 = vpop.f32.mrb[0].mxu0
        %v608 = vadd.f32 0.0, %v607
        %v609 = vpop.f32.mrb[0].mxu0
        %610 = vmatprep.mubr.f32.mxu0 0.0
        %611 = vmatmul.mubr.f32.gmra.mrb[0].mxu0 %v539
        %v612 = vpop.f32.mrb[0].mxu0
        %v613 = vadd.f32 0.0, %v612
        %v614 = vpop.f32.mrb[0].mxu0
        %615 = vdwg.mxu0
        %v616 = vld [vmem:[%s5] sm:$0x1]
        %v618 = vlaneseq
        %v619 = vshrl.u32 %v618, 7
        %v620 = vsub.s32 0, %v619
        %v621 = vrot.slane %v616, %v620
        %623 = vmatprep.subr.mxu0 0.0
        %624 = vmatpush1.msra.mxu0 %v608
        %625 = vmatprep.subr.mxu0 0.0
        %626 = vmatpush1.msra.mxu0 %v613
        %627 = vmatprep.subr.mxu0 0.0
        %628 = vmatpush1.msra.mxu0 0.0
        %629 = vmatprep.subr.mxu0 0.0
        %630 = vmatpush1.msra.mxu0 0.0
        %631 = vmatprep.subr.mxu0 0.0
        %632 = vmatpush1.msra.mxu0 0.0
        %633 = vmatprep.subr.mxu0 0.0
        %634 = vmatpush1.msra.mxu0 0.0
        %635 = vmatprep.subr.mxu0 0.0
        %636 = vmatpush1.msra.mxu0 0.0
        %637 = vmatprep.subr.mxu0 0.0
        %638 = vmatpush1.msra.mxu0 0.0
        %639 = vmatprep.subr.mxu0 0.0
        %640 = vmatpush1.msra.mxu0 0.0
        %641 = vmatprep.subr.mxu0 0.0
        %642 = vmatpush1.msra.mxu0 0.0
        %643 = vmatprep.subr.mxu0 0.0
        %644 = vmatpush1.msra.mxu0 0.0
        %645 = vmatprep.subr.mxu0 0.0
        %646 = vmatpush1.msra.mxu0 0.0
        %647 = vmatprep.subr.mxu0 0.0
        %648 = vmatpush1.msra.mxu0 0.0
        %649 = vmatprep.subr.mxu0 0.0
        %650 = vmatpush1.msra.mxu0 0.0
        %651 = vmatprep.subr.mxu0 0.0
        %652 = vmatpush1.msra.mxu0 0.0
        %653 = vmatprep.subr.mxu0 0.0
        %654 = vmatpush1.msra.mxu0 0.0
        %655 = vmatprep.subr.mxu0 0.0
        %656 = vmatpush1.msra.mxu0 0.0
        %657 = vmatprep.subr.mxu0 0.0
        %658 = vmatpush1.msra.mxu0 0.0
        %659 = vmatprep.subr.mxu0 0.0
        %660 = vmatpush1.msra.mxu0 0.0
        %661 = vmatprep.subr.mxu0 0.0
        %662 = vmatpush1.msra.mxu0 0.0
        %663 = vmatprep.subr.mxu0 0.0
        %664 = vmatpush1.msra.mxu0 0.0
        %665 = vmatprep.subr.mxu0 0.0
        %666 = vmatpush1.msra.mxu0 0.0
        %667 = vmatprep.subr.mxu0 0.0
        %668 = vmatpush1.msra.mxu0 0.0
        %669 = vmatprep.subr.mxu0 0.0
        %670 = vmatpush1.msra.mxu0 0.0
        %671 = vmatprep.subr.mxu0 0.0
        %672 = vmatpush1.msra.mxu0 0.0
        %673 = vmatprep.subr.mxu0 0.0
        %674 = vmatpush1.msra.mxu0 0.0
        %675 = vmatprep.subr.mxu0 0.0
        %676 = vmatpush1.msra.mxu0 0.0
        %677 = vmatprep.subr.mxu0 0.0
        %678 = vmatpush1.msra.mxu0 0.0
        %679 = vmatprep.subr.mxu0 0.0
        %680 = vmatpush1.msra.mxu0 0.0
        %681 = vmatprep.subr.mxu0 0.0
        %682 = vmatpush1.msra.mxu0 0.0
        %683 = vmatprep.subr.mxu0 0.0
        %684 = vmatpush1.msra.mxu0 0.0
        %685 = vmatprep.subr.mxu0 0.0
        %686 = vmatpush1.msra.mxu0 0.0
        %687 = vmatprep.mubr.f32.mxu0 0.0
        %688 = vmatmul.mubr.f32.gmra.mrb[0].mxu0 %v358
        %v689 = vpop.f32.mrb[0].mxu0
        %v690 = vadd.f32 %v621, %v689
        %v691 = vpop.f32.mrb[0].mxu0
        %692 = vmatprep.mubr.f32.mxu0 0.0
        %693 = vmatmul.mubr.f32.gmra.mrb[0].mxu0 %v361
        %v694 = vpop.f32.mrb[0].mxu0
        %v695 = vadd.f32 %v621, %v694
        %v696 = vpop.f32.mrb[0].mxu0
        %697 = vdwg.mxu0
        %v698 = vmax.f32 %v690, 0.0
        %v699 = vmax.f32 %v695, 0.0
        %v700 = vld [vmem:[%s6] sm:$0xff]
        %v701 = vld [vmem:[%s6 + $0x8] sm:$0xff]
        %v702 = vld [vmem:[%s6 + $0x10] sm:$0xff]
        %v703 = vld [vmem:[%s6 + $0x18] sm:$0xff]
        %v704 = vld [vmem:[%s7] sm:$0x1]
        %v706 = vlaneseq
        %v707 = vshrl.u32 %v706, 7
        %v708 = vsub.s32 0, %v707
        %v709 = vrot.slane %v704, %v708
        %v712 = vsel %vm534, %v698, 0
        %v715 = vsel %vm534, %v699, 0
        %717 = vmatprep.subr.mxu0 0.0
        %718 = vmatpush1.msra.mxu0 %v700
        %719 = vmatprep.subr.mxu0 0.0
        %720 = vmatpush1.msra.mxu0 %v701
        %721 = vmatprep.subr.mxu0 0.0
        %722 = vmatpush1.msra.mxu0 %v702
        %723 = vmatprep.subr.mxu0 0.0
        %724 = vmatpush1.msra.mxu0 %v703
        %725 = vmatprep.subr.mxu0 0.0
        %726 = vmatpush1.msra.mxu0 0.0
        %727 = vmatprep.subr.mxu0 0.0
        %728 = vmatpush1.msra.mxu0 0.0
        %729 = vmatprep.subr.mxu0 0.0
        %730 = vmatpush1.msra.mxu0 0.0
        %731 = vmatprep.subr.mxu0 0.0
        %732 = vmatpush1.msra.mxu0 0.0
        %733 = vmatprep.subr.mxu0 0.0
        %734 = vmatpush1.msra.mxu0 0.0
        %735 = vmatprep.subr.mxu0 0.0
        %736 = vmatpush1.msra.mxu0 0.0
        %737 = vmatprep.subr.mxu0 0.0
        %738 = vmatpush1.msra.mxu0 0.0
        %739 = vmatprep.subr.mxu0 0.0
        %740 = vmatpush1.msra.mxu0 0.0
        %741 = vmatprep.subr.mxu0 0.0
        %742 = vmatpush1.msra.mxu0 0.0
        %743 = vmatprep.subr.mxu0 0.0
        %744 = vmatpush1.msra.mxu0 0.0
        %745 = vmatprep.subr.mxu0 0.0
        %746 = vmatpush1.msra.mxu0 0.0
        %747 = vmatprep.subr.mxu0 0.0
        %748 = vmatpush1.msra.mxu0 0.0
        %749 = vmatprep.subr.mxu0 0.0
        %750 = vmatpush1.msra.mxu0 0.0
        %751 = vmatprep.subr.mxu0 0.0
        %752 = vmatpush1.msra.mxu0 0.0
        %753 = vmatprep.subr.mxu0 0.0
        %754 = vmatpush1.msra.mxu0 0.0
        %755 = vmatprep.subr.mxu0 0.0
        %756 = vmatpush1.msra.mxu0 0.0
        %757 = vmatprep.subr.mxu0 0.0
        %758 = vmatpush1.msra.mxu0 0.0
        %759 = vmatprep.subr.mxu0 0.0
        %760 = vmatpush1.msra.mxu0 0.0
        %761 = vmatprep.subr.mxu0 0.0
        %762 = vmatpush1.msra.mxu0 0.0
        %763 = vmatprep.subr.mxu0 0.0
        %764 = vmatpush1.msra.mxu0 0.0
        %765 = vmatprep.subr.mxu0 0.0
        %766 = vmatpush1.msra.mxu0 0.0
        %767 = vmatprep.subr.mxu0 0.0
        %768 = vmatpush1.msra.mxu0 0.0
        %769 = vmatprep.subr.mxu0 0.0
        %770 = vmatpush1.msra.mxu0 0.0
        %771 = vmatprep.subr.mxu0 0.0
        %772 = vmatpush1.msra.mxu0 0.0
        %773 = vmatprep.subr.mxu0 0.0
        %774 = vmatpush1.msra.mxu0 0.0
        %775 = vmatprep.subr.mxu0 0.0
        %776 = vmatpush1.msra.mxu0 0.0
        %777 = vmatprep.subr.mxu0 0.0
        %778 = vmatpush1.msra.mxu0 0.0
        %779 = vmatprep.subr.mxu0 0.0
        %780 = vmatpush1.msra.mxu0 0.0
        %781 = vmatprep.mubr.f32.mxu0 0.0
        %782 = vmatmul.mubr.f32.gmra.mrb[0].mxu0 %v712
        %v783 = vpop.f32.mrb[0].mxu0
        %v784 = vadd.f32 %v709, %v783
        %v785 = vpop.f32.mrb[0].mxu0
        %786 = vmatprep.mubr.f32.mxu0 0.0
        %787 = vmatmul.mubr.f32.gmra.mrb[0].mxu0 %v715
        %v788 = vpop.f32.mrb[0].mxu0
        %v789 = vadd.f32 %v709, %v788
        %v790 = vpop.f32.mrb[0].mxu0
        %791 = vdwg.mxu0
        %vm792 = vcmask 277504
        %793 = vst.msk [vmem:[%s341] sm:$0xff] %vm792, %v784
        %794 = vst.msk [vmem:[%s341 + $0x8] sm:$0xff] %vm792, %v789
        %s795 = sand.u32 %s210, 1
        %s796 = scalar_lea.sflag [#allocation4], %s795
        %s797 = sand.u32 %s210, 1
        %s798 = smul.addr %s797, 16
        %s799 = scalar_lea.vmem [#allocation7], %s798
        // Predicated region
        $region61: #{tpu_custom_call.1} parent=51 // pred_check
          %p800 = pneg %p220
        $region62: #{tpu_custom_call.1} parent=51 // pred_check_branch
          %802 = sbr.rel (%p800) target = $region64
        $region63: #{tpu_custom_call.1} parent=51 // pred_region
          %s804 = ssub.s32 256, 256
          %805 = vsyncadd %s796, %s804
          %s806 = smul.addr %s24, 2
          %s807 = smul.addr %s806, 128
          %s808 = scalar_lea.hbm %s8, %s807
          %s809 = sshll.u32 %s799, 4
          %s810 = int_to_ptr.vmem [resolvable:$true] %s809
          %815 = dma.vmem_to_hbm [thread:$0]  %s810, 256, %s808, %s796, 128, 128, 8
        $region64: #{tpu_custom_call.1} parent=51 // pred_fallthru
          _
      $region52: #{tpu_custom_call.1} parent=5 // pred_fallthru
        _
      %p816 = scmp.le.s32.totalorder 2, %s19
      // Predicated region
      $region65: #{tpu_custom_call.1} parent=5 // pred_check
        %p817 = pneg %p816
      $region66: #{tpu_custom_call.1} parent=5 // pred_check_branch
        %819 = sbr.rel (%p817) target = $region68
      $region67: #{tpu_custom_call.1} parent=5 // pred_region
        %s820 = ssub.s32 %s19, 2
        // Predicated region
        $region69: #{tpu_custom_call.1} parent=67 // pred_check
          %p821 = pneg %p226
        $region70: #{tpu_custom_call.1} parent=67 // pred_check_branch
          %823 = sbr.rel (%p821) target = $region72
        $region71: #{tpu_custom_call.1} parent=67 // pred_region
          %s824 = sand.u32 %s211, 1
          %s825 = scalar_lea.sflag [#allocation4], %s824
          %s826 = sand.u32 %s211, 1
          %s827 = smul.addr %s826, 16
          %s828 = scalar_lea.vmem [#allocation7], %s827
          %829 = dma.done %s825, 256
        $region72: #{tpu_custom_call.1} parent=67 // pred_fallthru
          _
      $region68: #{tpu_custom_call.1} parent=5 // pred_fallthru
        _
    $region6: #{tpu_custom_call.1} parent=1 // loop_footer
      %s23 = sadd.s32 1, %s19
    $region7: #{tpu_custom_call.1} parent=1 // loop_footer_branch
      %18 = sbr.rel target = $region3
    $region8: #{tpu_custom_call.1} parent=1 // loop_exit
      _
    %830 = vsyncpa [#allocation3], 1
    %s831 = scalar_lea.sflag [#allocation3], 1
    %832 = vsyncpa %s831, 1
    %833 = vsyncpa [#allocation6], 1
    %834 = vsyncpa [#allocation4], 1
    %s835 = scalar_lea.sflag [#allocation4], 1
    %836 = vsyncpa %s835, 1

</llo_original>
